<compile_context>
chip_gen: v6e
topology: v6e:2x2x1
jax: 0.10.0
libtpu: 0.0.40
codegen_flags: <defaults>
</compile_context>

<pallas_src>
import math
from typing import NamedTuple

import jax
import jax.numpy as jnp
from jax.experimental import pallas as pl
from jax.experimental.pallas import tpu as pltpu


def _round_up(n, m):
    return ((n + m - 1) // m) * m


def _device_tile_config():
    """(tm_default, th, vmem_limit_bytes) chosen per TPU generation."""
    try:
        kind = jax.devices()[0].device_kind.lower()
    except Exception:  # pragma: no cover - defensive
        kind = ""
    if "v7" in kind:
        # 64 MiB physical VMEM per TC: halve th, double tm, leave headroom.
        return 512, 256, 48 * 1024 * 1024
    if "v6" in kind:
        # 128 MiB VMEM, 918 TF/s: big tm to get AI ~ 2*tm >> 650 FLOP/byte.
        return 1024, 512, 100 * 1024 * 1024
    if "v5 lite" in kind or "v5e" in kind or "v5litepod" in kind:
        # v5e is already compute-bound at tm=256; keep th large.
        return 256, 512, 64 * 1024 * 1024
    # Conservative default for other / unknown generations.
    return 512, 512, 64 * 1024 * 1024


class FFNParams(NamedTuple):
    w1t: jax.Array   # (D_pad, H_pad) compute dtype, pre-transposed gate proj
    w3t: jax.Array   # (D_pad, H_pad) compute dtype, pre-transposed up proj
    w2t: jax.Array   # (H_pad, D_pad) compute dtype, pre-transposed down proj
    d: int
    h: int
    th: int
    tm_default: int
    vmem_limit: int
    compute_dtype: jnp.dtype


def prepare_ffn_params(w1, w2, w3, *, compute_dtype=jnp.bfloat16):
    """One-time (init) cast + pad + transpose of the FFN weights.

    w1, w3 : [H, D]  (PyTorch nn.Linear [out_features, in_features])
    w2     : [D, H]
    """
    H, D = w1.shape
    tm_default, th, vmem_limit = _device_tile_config()
    th = min(th, _round_up(H, 128))
    H_pad = _round_up(H, th)
    D_pad = _round_up(D, 128)

    w1t = jnp.pad(w1.astype(compute_dtype).T, ((0, D_pad - D), (0, H_pad - H)))
    w3t = jnp.pad(w3.astype(compute_dtype).T, ((0, D_pad - D), (0, H_pad - H)))
    w2t = jnp.pad(w2.astype(compute_dtype).T, ((0, H_pad - H), (0, D_pad - D)))

    return FFNParams(w1t=w1t, w3t=w3t, w2t=w2t, d=D, h=H, th=th,
                     tm_default=tm_default, vmem_limit=vmem_limit,
                     compute_dtype=compute_dtype)


def _ffn_kernel(x_ref, w1_ref, w3_ref, w2_ref, o_ref, acc_ref):
    # x_ref:  (tm, D_pad)    compute-dtype token tile
    # w1_ref: (D_pad, th)    gate proj tile (pre-transposed)
    # w3_ref: (D_pad, th)    up proj tile   (pre-transposed)
    # w2_ref: (th, D_pad)    down proj tile (pre-transposed)
    # o_ref:  (tm, D_pad)    compute-dtype output tile (resident over H axis)
    # acc_ref:(tm, D_pad)    f32 accumulator scratch
    j = pl.program_id(1)

    @pl.when(j == 0)
    def _():
        acc_ref[...] = jnp.zeros_like(acc_ref)

    x = x_ref[...]

    h1 = jnp.dot(x, w1_ref[...], preferred_element_type=jnp.float32)  # (tm, th)
    h3 = jnp.dot(x, w3_ref[...], preferred_element_type=jnp.float32)  # (tm, th)

    # silu(h1) * h3 ; sigmoid uses the EUP slot, muls the VPU.
    gated = (h1 * jax.nn.sigmoid(h1)) * h3

    # Partial down-projection over this H tile, f32 accumulation.
    acc_ref[...] += jnp.dot(gated.astype(w2_ref.dtype), w2_ref[...],
                            preferred_element_type=jnp.float32)

    @pl.when(j == pl.num_programs(1) - 1)
    def _():
        o_ref[...] = acc_ref[...].astype(o_ref.dtype)


def feed_forward(x, params: FFNParams):
    """SwiGLU FFN forward.  x : [B, S, D]."""
    B, S, D = x.shape
    assert D == params.d
    M = B * S
    D_pad = params.w1t.shape[0]
    H_pad = params.w1t.shape[1]
    th = params.th
    cdt = params.compute_dtype

    # M tile: decode path for tiny M, otherwise MXU-aligned and split into
    # >=2 tiles whenever M allows (feeds both v7x TensorCores).
    if M <= 64:
        tm = max(_round_up(M, 16), 16)
    else:
        tm = min(params.tm_default, _round_up(M, 128))
        if M > 128:
            tm = min(tm, _round_up(pl.cdiv(M, 2), 128))
    M_pad = _round_up(M, tm)

    xm = jnp.pad(x.reshape(M, D).astype(cdt), ((0, M_pad - M), (0, D_pad - D)))

    grid = (M_pad // tm, H_pad // th)

    out = pl.pallas_call(
        _ffn_kernel,
        out_shape=jax.ShapeDtypeStruct((M_pad, D_pad), cdt),
        grid_spec=pltpu.PrefetchScalarGridSpec(
            num_scalar_prefetch=0,
            grid=grid,
            in_specs=[
                pl.BlockSpec((tm, D_pad), lambda i, j: (i, 0)),    # x rows
                pl.BlockSpec((D_pad, th), lambda i, j: (0, j)),    # w1^T tile
                pl.BlockSpec((D_pad, th), lambda i, j: (0, j)),    # w3^T tile
                pl.BlockSpec((th, D_pad), lambda i, j: (j, 0)),    # w2^T tile
            ],
            out_specs=pl.BlockSpec((tm, D_pad), lambda i, j: (i, 0)),
            scratch_shapes=[pltpu.VMEM((tm, D_pad), jnp.float32)],
        ),
        compiler_params=pltpu.CompilerParams(
            dimension_semantics=("parallel", "arbitrary"),
            vmem_limit_bytes=params.vmem_limit,
        ),
        # TODO(synk): on v6e, if profiling shows exposed weight DMA, add
        # pipeline_mode=pl.Buffered(3) on the three weight BlockSpecs.
    )(xm, params.w1t, params.w3t, params.w2t)

    return out[:M, :D].astype(x.dtype).reshape(B, S, D)


if __name__ == "__main__":
    # Hidden dim computed exactly as the PyTorch module's __init__ does
    # (it overwrites the 4*dim value with int(2*num_dims/3) before rounding).
    num_dims = 32
    multiple_of = 4
    hidden_dim = 4 * num_dims
    hidden_dim = int(2 * num_dims / 3)
    hidden_dim = multiple_of * ((hidden_dim + multiple_of - 1) // multiple_of)  # 24

    batch, seq = 2, 8

    key = jax.random.PRNGKey(0)
    kx, k1, k2, k3 = jax.random.split(key, 4)

    x = jax.random.normal(kx, (batch, seq, num_dims), dtype=jnp.float32)

    # nn.Linear-style init: U(-1/sqrt(fan_in), 1/sqrt(fan_in)), [out, in] layout.
    b1 = 1.0 / math.sqrt(num_dims)
    b2 = 1.0 / math.sqrt(hidden_dim)
    w1 = jax.random.uniform(k1, (hidden_dim, num_dims), jnp.float32, -b1, b1)
    w2 = jax.random.uniform(k2, (num_dims, hidden_dim), jnp.float32, -b2, b2)
    w3 = jax.random.uniform(k3, (hidden_dim, num_dims), jnp.float32, -b1, b1)

    params = prepare_ffn_params(w1, w2, w3)          # one-time init-side work
    out = feed_forward(x, params)
    jax.block_until_ready(out)
    assert out.shape == (batch, seq, num_dims)

    # Reference matching the kernel's bf16-operand / f32-accumulate math
    # (with the kernel's final bf16 output cast applied).
    xb, w1b, w2b, w3b = (t.astype(jnp.bfloat16) for t in (x, w1, w2, w3))
    h1 = jnp.einsum("bsd,hd->bsh", xb, w1b, preferred_element_type=jnp.float32)
    h3 = jnp.einsum("bsd,hd->bsh", xb, w3b, preferred_element_type=jnp.float32)
    g = (h1 * jax.nn.sigmoid(h1) * h3).astype(jnp.bfloat16)
    ref = jnp.einsum("bsh,dh->bsd", g, w2b, preferred_element_type=jnp.float32)
    ref = ref.astype(jnp.bfloat16).astype(x.dtype)
    assert jnp.allclose(out, ref, atol=3e-3, rtol=3e-2), \
        float(jnp.max(jnp.abs(out - ref)))

    # Loose sanity check against full-f32 math (bf16 operand quantization).
    h1f = x @ w1.T
    h3f = x @ w3.T
    ref_f32 = (h1f * jax.nn.sigmoid(h1f) * h3f) @ w2.T
    assert jnp.allclose(out, ref_f32, atol=5e-2, rtol=5e-2)

    print("KERNEL_OK")
</pallas_src>

<mosaic_0001>
module attributes {stable_mosaic.version = 11 : i64} {
  func.func @_ffn_kernel(%arg0: i32, %arg1: i32, %arg2: memref<16x128xbf16, #tpu.memory_space<vmem>>, %arg3: memref<128x128xbf16, #tpu.memory_space<vmem>>, %arg4: memref<128x128xbf16, #tpu.memory_space<vmem>>, %arg5: memref<128x128xbf16, #tpu.memory_space<vmem>>, %arg6: memref<16x128xbf16, #tpu.memory_space<vmem>>, %arg7: memref<16x128xf32, #tpu.memory_space<vmem>>) attributes {dimension_semantics = [#tpu.dimension_semantics<parallel>, #tpu.dimension_semantics<arbitrary>], iteration_bounds = array<i64: 1, 1>, scalar_prefetch = 0 : i64, scratch_operands = 1 : i64, tpu.core_type = #tpu.core_type<tc>, window_params = [{transform_indices = @transform_0, window_bounds = array<i64: 16, 128>}, {transform_indices = @transform_1, window_bounds = array<i64: 128, 128>}, {transform_indices = @transform_2, window_bounds = array<i64: 128, 128>}, {transform_indices = @transform_3, window_bounds = array<i64: 128, 128>}, {transform_indices = @transform_4, window_bounds = array<i64: 16, 128>}]} {
    %c0_i32 = arith.constant 0 : i32
    %0 = arith.cmpi eq, %arg1, %c0_i32 : i32
    %1 = arith.extui %0 : i1 to i32
    %c0_i32_0 = arith.constant 0 : i32
    %2 = arith.cmpi ne, %1, %c0_i32_0 : i32
    scf.if %2 {
      %cst_17 = arith.constant 0.000000e+00 : f32
      %24 = vector.broadcast %cst_17 : f32 to vector<16x128xf32>
      %c0_18 = arith.constant 0 : index
      %c0_19 = arith.constant 0 : index
      %25 = vector.load %arg7[%c0_18, %c0_19] : memref<16x128xf32, #tpu.memory_space<vmem>>, vector<16x128xf32>
      tpu.vector_store %arg7[%c0_18, %c0_19], %24 {strides = array<i32>} : memref<16x128xf32, #tpu.memory_space<vmem>>, vector<16x128xf32>,
    } else {
    }
    %c0 = arith.constant 0 : index
    %c0_1 = arith.constant 0 : index
    %3 = vector.load %arg2[%c0, %c0_1] : memref<16x128xbf16, #tpu.memory_space<vmem>>, vector<16x128xbf16>
    %c0_2 = arith.constant 0 : index
    %c0_3 = arith.constant 0 : index
    %4 = vector.load %arg3[%c0_2, %c0_3] : memref<128x128xbf16, #tpu.memory_space<vmem>>, vector<128x128xbf16>
    %cst = arith.constant dense<0.000000e+00> : vector<16x128xf32>
    %5 = tpu.matmul %3, %4, %cst {dimension_numbers = #tpu.dot_dimension_numbers<[1], [0], [0], [1], [0, 0, 1, 1], [], []>} : vector<16x128xbf16>, vector<128x128xbf16>, vector<16x128xf32> -> vector<16x128xf32>
    %c0_4 = arith.constant 0 : index
    %c0_5 = arith.constant 0 : index
    %6 = vector.load %arg4[%c0_4, %c0_5] : memref<128x128xbf16, #tpu.memory_space<vmem>>, vector<128x128xbf16>
    %cst_6 = arith.constant dense<0.000000e+00> : vector<16x128xf32>
    %7 = tpu.matmul %3, %6, %cst_6 {dimension_numbers = #tpu.dot_dimension_numbers<[1], [0], [0], [1], [0, 0, 1, 1], [], []>} : vector<16x128xbf16>, vector<128x128xbf16>, vector<16x128xf32> -> vector<16x128xf32>
    %8 = arith.negf %5 : vector<16x128xf32>
    %9 = math.exp %8 : vector<16x128xf32>
    %cst_7 = arith.constant 1.000000e+00 : f32
    %10 = vector.broadcast %cst_7 : f32 to vector<16x128xf32>
    %11 = arith.addf %10, %9 : vector<16x128xf32>
    %12 = arith.divf %10, %11 : vector<16x128xf32>
    %13 = arith.mulf %5, %12 : vector<16x128xf32>
    %14 = arith.mulf %13, %7 : vector<16x128xf32>
    %c0_8 = arith.constant 0 : index
    %c0_9 = arith.constant 0 : index
    %15 = vector.load %arg7[%c0_8, %c0_9] : memref<16x128xf32, #tpu.memory_space<vmem>>, vector<16x128xf32>
    %16 = arith.truncf %14 : vector<16x128xf32> to vector<16x128xbf16>
    %c0_10 = arith.constant 0 : index
    %c0_11 = arith.constant 0 : index
    %17 = vector.load %arg5[%c0_10, %c0_11] : memref<128x128xbf16, #tpu.memory_space<vmem>>, vector<128x128xbf16>
    %cst_12 = arith.constant dense<0.000000e+00> : vector<16x128xf32>
    %18 = tpu.matmul %16, %17, %cst_12 {dimension_numbers = #tpu.dot_dimension_numbers<[1], [0], [0], [1], [0, 0, 1, 1], [], []>} : vector<16x128xbf16>, vector<128x128xbf16>, vector<16x128xf32> -> vector<16x128xf32>
    %19 = arith.addf %15, %18 : vector<16x128xf32>
    %c0_13 = arith.constant 0 : index
    %c0_14 = arith.constant 0 : index
    %20 = vector.load %arg7[%c0_13, %c0_14] : memref<16x128xf32, #tpu.memory_space<vmem>>, vector<16x128xf32>
    tpu.vector_store %arg7[%c0_13, %c0_14], %19 {strides = array<i32>} : memref<16x128xf32, #tpu.memory_space<vmem>>, vector<16x128xf32>,
    %c0_i32_15 = arith.constant 0 : i32
    %21 = arith.cmpi eq, %arg1, %c0_i32_15 : i32
    %22 = arith.extui %21 : i1 to i32
    %c0_i32_16 = arith.constant 0 : i32
    %23 = arith.cmpi ne, %22, %c0_i32_16 : i32
    scf.if %23 {
      %c0_17 = arith.constant 0 : index
      %c0_18 = arith.constant 0 : index
      %24 = vector.load %arg7[%c0_17, %c0_18] : memref<16x128xf32, #tpu.memory_space<vmem>>, vector<16x128xf32>
      %25 = arith.truncf %24 : vector<16x128xf32> to vector<16x128xbf16>
      %c0_19 = arith.constant 0 : index
      %c0_20 = arith.constant 0 : index
      %26 = vector.load %arg6[%c0_19, %c0_20] : memref<16x128xbf16, #tpu.memory_space<vmem>>, vector<16x128xbf16>
      tpu.vector_store %arg6[%c0_19, %c0_20], %25 {strides = array<i32>} : memref<16x128xbf16, #tpu.memory_space<vmem>>, vector<16x128xbf16>,
    } else {
    }
    return
  }
  func.func @transform_0(%arg0: i32, %arg1: i32) -> (i32, i32) {
    %c0_i32 = arith.constant 0 : i32
    %c0_i32_0 = arith.constant 0 : i32
    return %arg0, %c0_i32 : i32, i32
  }
  func.func @transform_1(%arg0: i32, %arg1: i32) -> (i32, i32) {
    %c0_i32 = arith.constant 0 : i32
    %c0_i32_0 = arith.constant 0 : i32
    return %c0_i32, %arg1 : i32, i32
  }
  func.func @transform_2(%arg0: i32, %arg1: i32) -> (i32, i32) {
    %c0_i32 = arith.constant 0 : i32
    %c0_i32_0 = arith.constant 0 : i32
    return %c0_i32, %arg1 : i32, i32
  }
  func.func @transform_3(%arg0: i32, %arg1: i32) -> (i32, i32) {
    %c0_i32 = arith.constant 0 : i32
    %c0_i32_0 = arith.constant 0 : i32
    return %arg1, %c0_i32 : i32, i32
  }
  func.func @transform_4(%arg0: i32, %arg1: i32) -> (i32, i32) {
    %c0_i32 = arith.constant 0 : i32
    %c0_i32_0 = arith.constant 0 : i32
    return %arg0, %c0_i32 : i32, i32
  }
}

</mosaic_0001>

<llo_original>
// kernel: tpu_custom_call.1
$region0: #{tpu_custom_call.1}
  #allocation0 [shape = 'u32[]', space=smem, size = 0x4, offset = 0x4, fixed_abs, tag = 'smem constant byte address 0x4 - core index']
  #allocation1 [shape = 'u32[144,128]{1,0:T(1,128)}', space=vmem, size = 0x12000, scoped, tag = 'internal scratch']
  #allocation2 [shape = 'f32[16,128]{1,0:T(8,128)}', space=vmem, size = 0x2000, scoped, tag = 'scratch operand']
  %s0 = inlined_call_operand.hbm [shape: bf16[16,128], index: 0, kind: input, shape index: {}]
  %s1 = inlined_call_operand.hbm [shape: bf16[128,128], index: 1, kind: input, shape index: {}]
  %s2 = inlined_call_operand.hbm [shape: bf16[128,128], index: 2, kind: input, shape index: {}]
  %s3 = inlined_call_operand.hbm [shape: bf16[128,128], index: 3, kind: input, shape index: {}]
  %s4 = inlined_call_operand.hbm [shape: bf16[16,128], index: 4, kind: output, shape index: {}]
  %s5 = sld [smem:[#allocation0]]
  $region50: #{tpu_custom_call.1} parent=0
    _
  %s7 = ssub.s32 1, %s5
  %s8 = scalar_select 0, %s7, %s5
  $region1: #{tpu_custom_call.1} parent=0
    #allocation3 [shape = 'u8[4096]{0}', space=vmem, size = 0x1000, scoped, tag = 'input window, operand 0, single buffered']
    #allocation4 [shape = 's32[1]{0}', space=sflag, size = 0x4, scoped, tag = 'scoped memory for tpu_custom_call.1']
    #allocation5 [shape = 's32[1]{0}', space=sflag, size = 0x4, scoped, tag = 'scoped memory for tpu_custom_call.1']
    #allocation6 [shape = 'u8[32768]{0}', space=vmem, size = 0x8000, scoped, tag = 'input window, operand 1, single buffered']
    #allocation7 [shape = 's32[1]{0}', space=sflag, size = 0x4, scoped, tag = 'scoped memory for tpu_custom_call.1']
    #allocation8 [shape = 'u8[32768]{0}', space=vmem, size = 0x8000, scoped, tag = 'input window, operand 2, single buffered']
    #allocation9 [shape = 'u8[32768]{0}', space=vmem, size = 0x8000, scoped, tag = 'input window, operand 3, single buffered']
    #allocation10 [shape = 's32[1]{0}', space=sflag, size = 0x4, scoped, tag = 'scoped memory for tpu_custom_call.1']
    #allocation11 [shape = 'u8[4096]{0}', space=vmem, size = 0x1000, scoped, tag = 'output window, operand 0, single buffered']
    %9 = vsyncpa [#allocation4], 0
    %10 = vsyncpa [#allocation7], 0
    %11 = vsyncpa [#allocation10], 0
    %12 = vsyncpa [#allocation5], 0
    // Predicated region
    $region2: #{tpu_custom_call.1} parent=1 // pred_check
      _
    $region3: #{tpu_custom_call.1} parent=1 // pred_check_branch
      %14 = sbr.rel (0) target = $region5
    $region4: #{tpu_custom_call.1} parent=1 // pred_region
      %s16 = ssub.s32 128, 128
      %17 = vsyncadd [#allocation4], %s16
      %s18 = sshll.u32 [#allocation3], 4
      %s19 = int_to_ptr.vmem [resolvable:$true] %s18
      %24 = dma.hbm_to_vmem [thread:$0]  %s0, 128, %s19, [#allocation4], 64, 64, 4
    $region5: #{tpu_custom_call.1} parent=1 // pred_fallthru
      _
    // Predicated region
    $region6: #{tpu_custom_call.1} parent=1 // pred_check
      _
    $region7: #{tpu_custom_call.1} parent=1 // pred_check_branch
      %26 = sbr.rel (0) target = $region9
    $region8: #{tpu_custom_call.1} parent=1 // pred_region
      %s28 = ssub.s32 1024, 1024
      %29 = vsyncadd [#allocation7], %s28
      %s30 = sshll.u32 [#allocation6], 4
      %s31 = int_to_ptr.vmem [resolvable:$true] %s30
      %36 = dma.hbm_to_vmem [thread:$0]  %s1, 1024, %s31, [#allocation7], 64, 64, 4
    $region9: #{tpu_custom_call.1} parent=1 // pred_fallthru
      _
    // Predicated region
    $region10: #{tpu_custom_call.1} parent=1 // pred_check
      _
    $region11: #{tpu_custom_call.1} parent=1 // pred_check_branch
      %38 = sbr.rel (0) target = $region13
    $region12: #{tpu_custom_call.1} parent=1 // pred_region
      %s40 = ssub.s32 1024, 1024
      %41 = vsyncadd [#allocation7], %s40
      %s42 = sshll.u32 [#allocation8], 4
      %s43 = int_to_ptr.vmem [resolvable:$true] %s42
      %48 = dma.hbm_to_vmem [thread:$0]  %s2, 1024, %s43, [#allocation7], 64, 64, 4
    $region13: #{tpu_custom_call.1} parent=1 // pred_fallthru
      _
    // Predicated region
    $region14: #{tpu_custom_call.1} parent=1 // pred_check
      _
    $region15: #{tpu_custom_call.1} parent=1 // pred_check_branch
      %50 = sbr.rel (0) target = $region17
    $region16: #{tpu_custom_call.1} parent=1 // pred_region
      %s52 = ssub.s32 1024, 1024
      %53 = vsyncadd [#allocation10], %s52
      %s54 = sshll.u32 [#allocation9], 4
      %s55 = int_to_ptr.vmem [resolvable:$true] %s54
      %60 = dma.hbm_to_vmem [thread:$0]  %s3, 1024, %s55, [#allocation10], 64, 64, 4
    $region17: #{tpu_custom_call.1} parent=1 // pred_fallthru
      _
    // Predicated region
    $region18: #{tpu_custom_call.1} parent=1 // pred_check
      _
    $region19: #{tpu_custom_call.1} parent=1 // pred_check_branch
      %62 = sbr.rel (0) target = $region21
    $region20: #{tpu_custom_call.1} parent=1 // pred_region
      %63 = dma.done [#allocation4], 128
    $region21: #{tpu_custom_call.1} parent=1 // pred_fallthru
      _
    // Predicated region
    $region22: #{tpu_custom_call.1} parent=1 // pred_check
      _
    $region23: #{tpu_custom_call.1} parent=1 // pred_check_branch
      %65 = sbr.rel (0) target = $region25
    $region24: #{tpu_custom_call.1} parent=1 // pred_region
      %66 = dma.done [#allocation7], 1024
    $region25: #{tpu_custom_call.1} parent=1 // pred_fallthru
      _
    // Predicated region
    $region26: #{tpu_custom_call.1} parent=1 // pred_check
      _
    $region27: #{tpu_custom_call.1} parent=1 // pred_check_branch
      %68 = sbr.rel (0) target = $region29
    $region28: #{tpu_custom_call.1} parent=1 // pred_region
      %69 = dma.done [#allocation7], 1024
    $region29: #{tpu_custom_call.1} parent=1 // pred_fallthru
      _
    // Predicated region
    $region30: #{tpu_custom_call.1} parent=1 // pred_check
      _
    $region31: #{tpu_custom_call.1} parent=1 // pred_check_branch
      %71 = sbr.rel (0) target = $region33
    $region32: #{tpu_custom_call.1} parent=1 // pred_region
      %72 = dma.done [#allocation10], 1024
    $region33: #{tpu_custom_call.1} parent=1 // pred_fallthru
      _
    %p74 = scmp.eq.s32.totalorder 0, 0
    // Predicated region
    $region34: #{tpu_custom_call.1} parent=1 // pred_check
      %p75 = pneg %p74
    $region35: #{tpu_custom_call.1} parent=1 // pred_check_branch
      %77 = sbr.rel (%p75) target = $region37
    $region36: #{tpu_custom_call.1} parent=1 // pred_region
      %78 = vst [vmem:[#allocation2] sm:$0xff] 0.0
      %79 = vst [vmem:[#allocation2 + $0x8] sm:$0xff] 0.0
    $region37: #{tpu_custom_call.1} parent=1 // pred_fallthru
      _
    %v80 = vld [vmem:[#allocation3] sm:$0xf]
    %v81 = vld [vmem:[#allocation3 + $0x4] sm:$0xf]
    %v82 = vld [vmem:[#allocation6] sm:$0xf]
    %v83 = vld [vmem:[#allocation6 + $0x4] sm:$0xf]
    %v84 = vld [vmem:[#allocation6 + $0x8] sm:$0xf]
    %v85 = vld [vmem:[#allocation6 + $0xc] sm:$0xf]
    %v86 = vld [vmem:[#allocation6 + $0x10] sm:$0xf]
    %v87 = vld [vmem:[#allocation6 + $0x14] sm:$0xf]
    %v88 = vld [vmem:[#allocation6 + $0x18] sm:$0xf]
    %v89 = vld [vmem:[#allocation6 + $0x1c] sm:$0xf]
    %v90 = vld [vmem:[#allocation6 + $0x20] sm:$0xf]
    %v91 = vld [vmem:[#allocation6 + $0x24] sm:$0xf]
    %v92 = vld [vmem:[#allocation6 + $0x28] sm:$0xf]
    %v93 = vld [vmem:[#allocation6 + $0x2c] sm:$0xf]
    %v94 = vld [vmem:[#allocation6 + $0x30] sm:$0xf]
    %v95 = vld [vmem:[#allocation6 + $0x34] sm:$0xf]
    %v96 = vld [vmem:[#allocation6 + $0x38] sm:$0xf]
    %v97 = vld [vmem:[#allocation6 + $0x3c] sm:$0xf]
    %v100 = vunpack.c.l.b16 %v80
    %v101 = vunpack.c.l.b16 %v81
    %v102 = vpack.c.b16 %v101, %v100
    %v120 = vunpack.c.l.b16 %v82
    %v121 = vunpack.c.l.b16 %v83
    %v122 = vunpack.c.l.b16 %v84
    %v123 = vunpack.c.l.b16 %v85
    %v124 = vunpack.c.l.b16 %v86
    %v125 = vunpack.c.l.b16 %v87
    %v126 = vunpack.c.l.b16 %v88
    %v127 = vunpack.c.l.b16 %v89
    %v128 = vunpack.c.l.b16 %v90
    %v129 = vunpack.c.l.b16 %v91
    %v130 = vunpack.c.l.b16 %v92
    %v131 = vunpack.c.l.b16 %v93
    %v132 = vunpack.c.l.b16 %v94
    %v133 = vunpack.c.l.b16 %v95
    %v134 = vunpack.c.l.b16 %v96
    %v135 = vunpack.c.l.b16 %v97
    %v136 = vpack.c.b16 %v121, %v120
    %v137 = vpack.c.b16 %v123, %v122
    %v138 = vpack.c.b16 %v125, %v124
    %v139 = vpack.c.b16 %v127, %v126
    %v140 = vpack.c.b16 %v129, %v128
    %v141 = vpack.c.b16 %v131, %v130
    %v142 = vpack.c.b16 %v133, %v132
    %v143 = vpack.c.b16 %v135, %v134
    %152 = vmatprep.subr.bf16.mxu0 0
    %153 = vmatpush1.bf16.msra.mxu0 %v143
    %154 = vmatprep.subr.bf16.mxu0 0
    %155 = vmatpush1.bf16.msra.mxu0 %v142
    %156 = vmatprep.subr.bf16.mxu0 0
    %157 = vmatpush1.bf16.msra.mxu0 %v141
    %158 = vmatprep.subr.bf16.mxu0 0
    %159 = vmatpush1.bf16.msra.mxu0 %v140
    %160 = vmatprep.subr.bf16.mxu0 0
    %161 = vmatpush1.bf16.msra.mxu0 %v139
    %162 = vmatprep.subr.bf16.mxu0 0
    %163 = vmatpush1.bf16.msra.mxu0 %v138
    %164 = vmatprep.subr.bf16.mxu0 0
    %165 = vmatpush1.bf16.msra.mxu0 %v137
    %166 = vmatprep.subr.bf16.mxu0 0
    %167 = vmatpush1.bf16.msra.mxu0 %v136
    %168 = vmatprep.subr.bf16.mxu0 0
    %169 = vmatpush2.bf16.msra.mxu0 0
    %170 = vmatprep.subr.bf16.mxu0 0
    %171 = vmatpush2.bf16.msra.mxu0 0
    %172 = vmatprep.subr.bf16.mxu0 0
    %173 = vmatpush2.bf16.msra.mxu0 0
    %174 = vmatprep.subr.bf16.mxu0 0
    %175 = vmatpush2.bf16.msra.mxu0 0
    %176 = vmatprep.subr.bf16.mxu0 0
    %177 = vmatpush2.bf16.msra.mxu0 0
    %178 = vmatprep.subr.bf16.mxu0 0
    %179 = vmatpush2.bf16.msra.mxu0 0
    %180 = vmatprep.subr.bf16.mxu0 0
    %181 = vmatpush2.bf16.msra.mxu0 0
    %182 = vmatprep.subr.bf16.mxu0 0
    %183 = vmatpush2.bf16.msra.mxu0 0
    %184 = vmatprep.mubr.bf16.mxu0 0
    %185 = vmatmul.mubr.bf16.gmra.mxu0 %v102
    %v186 = vpop.f32.mrf.mxu0
    %v187 = vadd.f32 0.0, %v186
    %v188 = vpop.f32.mrf.mxu0
    %v189 = vpop.f32.mrf.mxu0
    %v190 = vadd.f32 0.0, %v189
    %v191 = vpop.f32.mrf.mxu0
    %192 = vdwg.mxu0
    %v193 = vld [vmem:[#allocation8] sm:$0xf]
    %v194 = vld [vmem:[#allocation8 + $0x4] sm:$0xf]
    %v195 = vld [vmem:[#allocation8 + $0x8] sm:$0xf]
    %v196 = vld [vmem:[#allocation8 + $0xc] sm:$0xf]
    %v197 = vld [vmem:[#allocation8 + $0x10] sm:$0xf]
    %v198 = vld [vmem:[#allocation8 + $0x14] sm:$0xf]
    %v199 = vld [vmem:[#allocation8 + $0x18] sm:$0xf]
    %v200 = vld [vmem:[#allocation8 + $0x1c] sm:$0xf]
    %v201 = vld [vmem:[#allocation8 + $0x20] sm:$0xf]
    %v202 = vld [vmem:[#allocation8 + $0x24] sm:$0xf]
    %v203 = vld [vmem:[#allocation8 + $0x28] sm:$0xf]
    %v204 = vld [vmem:[#allocation8 + $0x2c] sm:$0xf]
    %v205 = vld [vmem:[#allocation8 + $0x30] sm:$0xf]
    %v206 = vld [vmem:[#allocation8 + $0x34] sm:$0xf]
    %v207 = vld [vmem:[#allocation8 + $0x38] sm:$0xf]
    %v208 = vld [vmem:[#allocation8 + $0x3c] sm:$0xf]
    %v225 = vunpack.c.l.b16 %v193
    %v226 = vunpack.c.l.b16 %v194
    %v227 = vunpack.c.l.b16 %v195
    %v228 = vunpack.c.l.b16 %v196
    %v229 = vunpack.c.l.b16 %v197
    %v230 = vunpack.c.l.b16 %v198
    %v231 = vunpack.c.l.b16 %v199
    %v232 = vunpack.c.l.b16 %v200
    %v233 = vunpack.c.l.b16 %v201
    %v234 = vunpack.c.l.b16 %v202
    %v235 = vunpack.c.l.b16 %v203
    %v236 = vunpack.c.l.b16 %v204
    %v237 = vunpack.c.l.b16 %v205
    %v238 = vunpack.c.l.b16 %v206
    %v239 = vunpack.c.l.b16 %v207
    %v240 = vunpack.c.l.b16 %v208
    %v241 = vpack.c.b16 %v226, %v225
    %v242 = vpack.c.b16 %v228, %v227
    %v243 = vpack.c.b16 %v230, %v229
    %v244 = vpack.c.b16 %v232, %v231
    %v245 = vpack.c.b16 %v234, %v233
    %v246 = vpack.c.b16 %v236, %v235
    %v247 = vpack.c.b16 %v238, %v237
    %v248 = vpack.c.b16 %v240, %v239
    %257 = vmatprep.subr.bf16.mxu0 0
    %258 = vmatpush1.bf16.msra.mxu0 %v248
    %259 = vmatprep.subr.bf16.mxu0 0
    %260 = vmatpush1.bf16.msra.mxu0 %v247
    %261 = vmatprep.subr.bf16.mxu0 0
    %262 = vmatpush1.bf16.msra.mxu0 %v246
    %263 = vmatprep.subr.bf16.mxu0 0
    %264 = vmatpush1.bf16.msra.mxu0 %v245
    %265 = vmatprep.subr.bf16.mxu0 0
    %266 = vmatpush1.bf16.msra.mxu0 %v244
    %267 = vmatprep.subr.bf16.mxu0 0
    %268 = vmatpush1.bf16.msra.mxu0 %v243
    %269 = vmatprep.subr.bf16.mxu0 0
    %270 = vmatpush1.bf16.msra.mxu0 %v242
    %271 = vmatprep.subr.bf16.mxu0 0
    %272 = vmatpush1.bf16.msra.mxu0 %v241
    %273 = vmatprep.subr.bf16.mxu0 0
    %274 = vmatpush2.bf16.msra.mxu0 0
    %275 = vmatprep.subr.bf16.mxu0 0
    %276 = vmatpush2.bf16.msra.mxu0 0
    %277 = vmatprep.subr.bf16.mxu0 0
    %278 = vmatpush2.bf16.msra.mxu0 0
    %279 = vmatprep.subr.bf16.mxu0 0
    %280 = vmatpush2.bf16.msra.mxu0 0
    %281 = vmatprep.subr.bf16.mxu0 0
    %282 = vmatpush2.bf16.msra.mxu0 0
    %283 = vmatprep.subr.bf16.mxu0 0
    %284 = vmatpush2.bf16.msra.mxu0 0
    %285 = vmatprep.subr.bf16.mxu0 0
    %286 = vmatpush2.bf16.msra.mxu0 0
    %287 = vmatprep.subr.bf16.mxu0 0
    %288 = vmatpush2.bf16.msra.mxu0 0
    %289 = vmatprep.mubr.bf16.mxu0 0
    %290 = vmatmul.mubr.bf16.gmra.mxu0 %v102
    %v291 = vpop.f32.mrf.mxu0
    %v292 = vadd.f32 0.0, %v291
    %v293 = vpop.f32.mrf.mxu0
    %v294 = vpop.f32.mrf.mxu0
    %v295 = vadd.f32 0.0, %v294
    %v296 = vpop.f32.mrf.mxu0
    %297 = vdwg.mxu0
    %v298 = vxor.u32 %v187, 2147483648
    %v299 = vxor.u32 %v190, 2147483648
    %v300 = vmul.f32 %v298, 1.442695
    %v301 = vpow.pop %v300
    %v302 = vmul.f32 %v299, 1.442695
    %v303 = vpow.pop %v302
    %v304 = vadd.f32 %v301, 1.0
    %v305 = vadd.f32 %v303, 1.0
    %v306 = vrcp.pop %v304
    %v307 = vmul.f32 1.0, %v306
    %v308 = vrcp.pop %v305
    %v309 = vmul.f32 1.0, %v308
    %v310 = vmul.f32 %v187, %v307
    %v311 = vmul.f32 %v190, %v309
    %v312 = vmul.f32 %v310, %v292
    %v313 = vmul.f32 %v311, %v295
    %v314 = vld [vmem:[#allocation2] sm:$0xff]
    %v315 = vld [vmem:[#allocation2 + $0x8] sm:$0xff]
    %v316 = vpack.c.bf16 %v313, %v312
    %v317 = vld [vmem:[#allocation9] sm:$0xf]
    %v318 = vld [vmem:[#allocation9 + $0x4] sm:$0xf]
    %v319 = vld [vmem:[#allocation9 + $0x8] sm:$0xf]
    %v320 = vld [vmem:[#allocation9 + $0xc] sm:$0xf]
    %v321 = vld [vmem:[#allocation9 + $0x10] sm:$0xf]
    %v322 = vld [vmem:[#allocation9 + $0x14] sm:$0xf]
    %v323 = vld [vmem:[#allocation9 + $0x18] sm:$0xf]
    %v324 = vld [vmem:[#allocation9 + $0x1c] sm:$0xf]
    %v325 = vld [vmem:[#allocation9 + $0x20] sm:$0xf]
    %v326 = vld [vmem:[#allocation9 + $0x24] sm:$0xf]
    %v327 = vld [vmem:[#allocation9 + $0x28] sm:$0xf]
    %v328 = vld [vmem:[#allocation9 + $0x2c] sm:$0xf]
    %v329 = vld [vmem:[#allocation9 + $0x30] sm:$0xf]
    %v330 = vld [vmem:[#allocation9 + $0x34] sm:$0xf]
    %v331 = vld [vmem:[#allocation9 + $0x38] sm:$0xf]
    %v332 = vld [vmem:[#allocation9 + $0x3c] sm:$0xf]
    %v349 = vunpack.c.l.b16 %v317
    %v350 = vunpack.c.l.b16 %v318
    %v351 = vunpack.c.l.b16 %v319
    %v352 = vunpack.c.l.b16 %v320
    %v353 = vunpack.c.l.b16 %v321
    %v354 = vunpack.c.l.b16 %v322
    %v355 = vunpack.c.l.b16 %v323
    %v356 = vunpack.c.l.b16 %v324
    %v357 = vunpack.c.l.b16 %v325
    %v358 = vunpack.c.l.b16 %v326
    %v359 = vunpack.c.l.b16 %v327
    %v360 = vunpack.c.l.b16 %v328
    %v361 = vunpack.c.l.b16 %v329
    %v362 = vunpack.c.l.b16 %v330
    %v363 = vunpack.c.l.b16 %v331
    %v364 = vunpack.c.l.b16 %v332
    %v365 = vpack.c.b16 %v350, %v349
    %v366 = vpack.c.b16 %v352, %v351
    %v367 = vpack.c.b16 %v354, %v353
    %v368 = vpack.c.b16 %v356, %v355
    %v369 = vpack.c.b16 %v358, %v357
    %v370 = vpack.c.b16 %v360, %v359
    %v371 = vpack.c.b16 %v362, %v361
    %v372 = vpack.c.b16 %v364, %v363
    %381 = vmatprep.subr.bf16.mxu0 0
    %382 = vmatpush1.bf16.msra.mxu0 %v372
    %383 = vmatprep.subr.bf16.mxu0 0
    %384 = vmatpush1.bf16.msra.mxu0 %v371
    %385 = vmatprep.subr.bf16.mxu0 0
    %386 = vmatpush1.bf16.msra.mxu0 %v370
    %387 = vmatprep.subr.bf16.mxu0 0
    %388 = vmatpush1.bf16.msra.mxu0 %v369
    %389 = vmatprep.subr.bf16.mxu0 0
    %390 = vmatpush1.bf16.msra.mxu0 %v368
    %391 = vmatprep.subr.bf16.mxu0 0
    %392 = vmatpush1.bf16.msra.mxu0 %v367
    %393 = vmatprep.subr.bf16.mxu0 0
    %394 = vmatpush1.bf16.msra.mxu0 %v366
    %395 = vmatprep.subr.bf16.mxu0 0
    %396 = vmatpush1.bf16.msra.mxu0 %v365
    %397 = vmatprep.subr.bf16.mxu0 0
    %398 = vmatpush2.bf16.msra.mxu0 0
    %399 = vmatprep.subr.bf16.mxu0 0
    %400 = vmatpush2.bf16.msra.mxu0 0
    %401 = vmatprep.subr.bf16.mxu0 0
    %402 = vmatpush2.bf16.msra.mxu0 0
    %403 = vmatprep.subr.bf16.mxu0 0
    %404 = vmatpush2.bf16.msra.mxu0 0
    %405 = vmatprep.subr.bf16.mxu0 0
    %406 = vmatpush2.bf16.msra.mxu0 0
    %407 = vmatprep.subr.bf16.mxu0 0
    %408 = vmatpush2.bf16.msra.mxu0 0
    %409 = vmatprep.subr.bf16.mxu0 0
    %410 = vmatpush2.bf16.msra.mxu0 0
    %411 = vmatprep.subr.bf16.mxu0 0
    %412 = vmatpush2.bf16.msra.mxu0 0
    %413 = vmatprep.mubr.bf16.mxu0 0
    %414 = vmatmul.mubr.bf16.gmra.mxu0 %v316
    %v415 = vpop.f32.mrf.mxu0
    %v416 = vadd.f32 0.0, %v415
    %v417 = vpop.f32.mrf.mxu0
    %v418 = vpop.f32.mrf.mxu0
    %v419 = vadd.f32 0.0, %v418
    %v420 = vpop.f32.mrf.mxu0
    %421 = vdwg.mxu0
    %v422 = vadd.f32 %v314, %v416
    %v423 = vadd.f32 %v315, %v419
    %424 = vst [vmem:[#allocation2] sm:$0xff] %v422
    %425 = vst [vmem:[#allocation2 + $0x8] sm:$0xff] %v423
    // Predicated region
    $region38: #{tpu_custom_call.1} parent=1 // pred_check
      %p426 = pneg %p74
    $region39: #{tpu_custom_call.1} parent=1 // pred_check_branch
      %428 = sbr.rel (%p426) target = $region41
    $region40: #{tpu_custom_call.1} parent=1 // pred_region
      %v429 = vld [vmem:[#allocation2] sm:$0xff]
      %v430 = vld [vmem:[#allocation2 + $0x8] sm:$0xff]
      %v431 = vpack.c.bf16 %v430, %v429
      %v433 = vunpack.c.l.b16 %v431
      %v434 = vunpack.c.h.b16 %v431
      %v435 = vpack.c.b16 %v433, %v433
      %v436 = vpack.c.b16 %v434, %v434
      %439 = vst [vmem:[#allocation11] sm:$0xf] %v435
      %440 = vst [vmem:[#allocation11 + $0x4] sm:$0xf] %v436
    $region41: #{tpu_custom_call.1} parent=1 // pred_fallthru
      _
    // Predicated region
    $region42: #{tpu_custom_call.1} parent=1 // pred_check
      _
    $region43: #{tpu_custom_call.1} parent=1 // pred_check_branch
      %442 = sbr.rel (0) target = $region45
    $region44: #{tpu_custom_call.1} parent=1 // pred_region
      %s444 = ssub.s32 128, 128
      %445 = vsyncadd [#allocation5], %s444
      %s446 = sshll.u32 [#allocation11], 4
      %s447 = int_to_ptr.vmem [resolvable:$true] %s446
      %452 = dma.vmem_to_hbm [thread:$0]  %s447, 128, %s4, [#allocation5], 64, 64, 4
    $region45: #{tpu_custom_call.1} parent=1 // pred_fallthru
      _
    // Predicated region
    $region46: #{tpu_custom_call.1} parent=1 // pred_check
      _
    $region47: #{tpu_custom_call.1} parent=1 // pred_check_branch
      %454 = sbr.rel (0) target = $region49
    $region48: #{tpu_custom_call.1} parent=1 // pred_region
      %455 = dma.done [#allocation5], 128
    $region49: #{tpu_custom_call.1} parent=1 // pred_fallthru
      _
    %456 = vsyncpa [#allocation4], 1
    %457 = vsyncpa [#allocation7], 1
    %458 = vsyncpa [#allocation10], 1
    %459 = vsyncpa [#allocation5], 1

</llo_original>
